<compile_context>
chip_gen: v5e
topology: v5e:2x2
jax: 0.10.0
libtpu: 0.0.40
codegen_flags: <defaults>
</compile_context>

<pallas_src>
import jax
import jax.numpy as jnp
from jax.experimental import pallas as pl
from jax.experimental.pallas import tpu as pltpu


# ------------------------------ helpers ------------------------------------

def _round_up(x, m):
    return ((x + m - 1) // m) * m


def _pad2d(a, rows, cols):
    r, c = a.shape
    return jnp.pad(a, ((0, rows - r), (0, cols - c)))


# ----------------------------- Pallas kernel -------------------------------

def _dual_mlp_kernel(xp_ref, w1p_ref, b1p_ref, w2p_ref, b2p_ref,
                     xi_ref, w1i_ref, b1i_ref, w2i_ref, b2i_ref,
                     op_ref, oi_ref):
    """Per grid step j: o[:, j*TN:(j+1)*TN] = relu(x@W1+b1) @ W2[:, tile] + b2[tile]
    for both the pose head and the id head."""

    def head(x_ref, w1_ref, b1_ref, w2_ref, b2_ref, o_ref):
        # Layer 1 (tiny, resident operands, recomputed per tile -- effectively free).
        h = jnp.dot(x_ref[...], w1_ref[...], preferred_element_type=jnp.float32)
        h = jnp.maximum(h + b1_ref[...], 0.0)
        # Layer 2: lane-dense streaming matmul over the current W2 tile.
        y = jnp.dot(h.astype(jnp.bfloat16), w2_ref[...],
                    preferred_element_type=jnp.float32)
        o_ref[...] = (y + b2_ref[...]).astype(o_ref.dtype)

    head(xp_ref, w1p_ref, b1p_ref, w2p_ref, b2p_ref, op_ref)
    head(xi_ref, w1i_ref, b1i_ref, w2i_ref, b2i_ref, oi_ref)


def dual_mlp2(xp, w1p, b1p, w2p, b2p, xi, w1i, b1i, w2i, b2i, *, tn):
    """Fused pose+id 2-layer MLPs, tiled over the (shared) output-feature axis.

    All operands are already padded:
      xp:(B,DinP) bf16   w1p:(DinP,H) bf16   b1p:(1,H) f32
      w2p:(H,Dout) bf16  b2p:(1,Dout) f32    (and the same for the id head)
    Dout is a multiple of tn, tn is a multiple of 128, B a multiple of 8.
    Returns two (B, Dout) f32 arrays.
    """
    B, dinp = xp.shape
    _, dini = xi.shape
    H = w1p.shape[1]
    Dout = w2p.shape[1]
    assert Dout % tn == 0 and tn % 128 == 0 and B % 8 == 0
    grid = (Dout // tn,)

    def resident(shape):
        return pl.BlockSpec(shape, lambda j: (0,) * len(shape))

    tiled_w = pl.BlockSpec((H, tn), lambda j: (0, j))
    tiled_b = pl.BlockSpec((1, tn), lambda j: (0, j))
    tiled_o = pl.BlockSpec((B, tn), lambda j: (0, j))

    flops = 2 * B * (dinp * H + dini * H + 2 * H * Dout)
    bytes_accessed = (
        2 * (w2p.size + w2i.size + w1p.size + w1i.size + xp.size + xi.size)  # bf16
        + 4 * (b1p.size + b1i.size + b2p.size + b2i.size)                    # f32
        + 4 * 2 * B * Dout                                                   # outputs
    )

    return pl.pallas_call(
        _dual_mlp_kernel,
        out_shape=(jax.ShapeDtypeStruct((B, Dout), jnp.float32),
                   jax.ShapeDtypeStruct((B, Dout), jnp.float32)),
        grid=grid,
        in_specs=[
            resident((B, dinp)), resident((dinp, H)), resident((1, H)),
            tiled_w, tiled_b,
            resident((B, dini)), resident((dini, H)), resident((1, H)),
            tiled_w, tiled_b,
        ],
        out_specs=(tiled_o, tiled_o),
        compiler_params=pltpu.CompilerParams(
            dimension_semantics=("parallel",)),
        cost_estimate=pl.CostEstimate(flops=flops, transcendentals=0,
                                      bytes_accessed=bytes_accessed),
    )(xp, w1p, b1p, w2p, b2p, xi, w1i, b1i, w2i, b2i)


# --------------------------- SkinRefineNet (JAX) ---------------------------

class SkinRefineNet:
    """JAX/Pallas port of the PyTorch SkinRefineNet forward pass."""

    # Default Dout tile; multiple of 128.  1024 fits comfortably inside the
    # 64 MiB v7x VMEM with double buffering for both heads; bump to 2048-4096
    # on v6e for slightly fewer grid steps if desired.
    TILE_N = 1024

    def __init__(self, joint_num, vertex_num, id_code_dim, hidden=256, seed=0,
                 tile_n=TILE_N):
        self.joint_num = joint_num
        self.vertex_num = vertex_num
        self.id_code_dim = id_code_dim
        self.hidden = hidden

        key = jax.random.PRNGKey(seed)
        ks = jax.random.split(key, 8)

        def _linear_init(kw, kb, fan_in, fan_out):
            # Deterministic init (uniform, PyTorch-style bound 1/sqrt(fan_in)).
            bound = 1.0 / jnp.sqrt(jnp.float32(fan_in))
            w = jax.random.uniform(kw, (fan_in, fan_out), jnp.float32, -bound, bound)
            b = jax.random.uniform(kb, (1, fan_out), jnp.float32, -bound, bound)
            return w, b

        J3 = joint_num * 3
        V3 = vertex_num * 3
        # Master f32 parameters (kept for reference / export).
        self.pose_w1, self.pose_b1 = _linear_init(ks[0], ks[1], J3, hidden)
        self.pose_w2, self.pose_b2 = _linear_init(ks[2], ks[3], hidden, V3)
        self.id_w1, self.id_b1 = _linear_init(ks[4], ks[5], id_code_dim, hidden)
        self.id_w2, self.id_b2 = _linear_init(ks[6], ks[7], hidden, V3)

        # Static padded / bf16 kernel operands (done once, outside the hot path).
        self.dout = V3
        self.tn = min(tile_n, _round_up(V3, 128))
        self.dout_pad = _round_up(V3, self.tn)
        self.din_p = _round_up(J3, 128)
        self.din_i = _round_up(id_code_dim, 128)

        self.k_w1p = _pad2d(self.pose_w1, self.din_p, hidden).astype(jnp.bfloat16)
        self.k_b1p = self.pose_b1                                        # (1,H) f32
        self.k_w2p = _pad2d(self.pose_w2, hidden, self.dout_pad).astype(jnp.bfloat16)
        self.k_b2p = _pad2d(self.pose_b2, 1, self.dout_pad)              # f32

        self.k_w1i = _pad2d(self.id_w1, self.din_i, hidden).astype(jnp.bfloat16)
        self.k_b1i = self.id_b1
        self.k_w2i = _pad2d(self.id_w2, hidden, self.dout_pad).astype(jnp.bfloat16)
        self.k_b2i = _pad2d(self.id_b2, 1, self.dout_pad)

    def __call__(self, joint_euler, id_code):
        # joint_euler: (B, J, 3) or (B, J*3); id_code: (B, id_code_dim)
        jp = joint_euler.reshape(-1, self.joint_num * 3)
        ic = id_code.reshape(-1, self.id_code_dim)
        B = jp.shape[0]
        b_pad = _round_up(max(B, 8), 8)

        xp = _pad2d(jp, b_pad, self.din_p).astype(jnp.bfloat16)
        xi = _pad2d(ic, b_pad, self.din_i).astype(jnp.bfloat16)

        op, oi = dual_mlp2(xp, self.k_w1p, self.k_b1p, self.k_w2p, self.k_b2p,
                           xi, self.k_w1i, self.k_b1i, self.k_w2i, self.k_b2i,
                           tn=self.tn)

        pose_corrective = op[:B, :self.dout].reshape(B, self.vertex_num, 3)
        id_corrective = oi[:B, :self.dout].reshape(B, self.vertex_num, 3)
        return pose_corrective, id_corrective


# --------------------------------- main ------------------------------------

if __name__ == "__main__":
    # Small, forward-consistent shapes.
    B = 2            # batch
    JOINT_NUM = 8    # -> joint_euler feature dim 24
    VERTEX_NUM = 16  # -> output feature dim 48
    ID_CODE_DIM = 32
    HIDDEN = 256

    net = SkinRefineNet(JOINT_NUM, VERTEX_NUM, ID_CODE_DIM, hidden=HIDDEN, seed=0)

    key = jax.random.PRNGKey(0)
    k1, k2 = jax.random.split(key)
    joint_euler = jax.random.normal(k1, (B, JOINT_NUM, 3), jnp.float32)
    id_code = jax.random.normal(k2, (B, ID_CODE_DIM), jnp.float32)

    pose_corrective, id_corrective = net(joint_euler, id_code)
    jax.block_until_ready((pose_corrective, id_corrective))

    assert pose_corrective.shape == (B, VERTEX_NUM, 3)
    assert id_corrective.shape == (B, VERTEX_NUM, 3)

    # Reference check against plain JAX with the same bf16 quantization of
    # weights / activations (the kernel accumulates in f32).
    def ref_mlp(x, w1, b1, w2, b2):
        xq = x.astype(jnp.bfloat16).astype(jnp.float32)
        w1q = w1.astype(jnp.bfloat16).astype(jnp.float32)
        w2q = w2.astype(jnp.bfloat16).astype(jnp.float32)
        h = jnp.maximum(xq @ w1q + b1, 0.0)
        hq = h.astype(jnp.bfloat16).astype(jnp.float32)
        return hq @ w2q + b2

    ref_pose = ref_mlp(joint_euler.reshape(B, -1), net.pose_w1, net.pose_b1,
                       net.pose_w2, net.pose_b2).reshape(B, VERTEX_NUM, 3)
    ref_id = ref_mlp(id_code, net.id_w1, net.id_b1,
                     net.id_w2, net.id_b2).reshape(B, VERTEX_NUM, 3)
    assert jnp.allclose(pose_corrective, ref_pose, atol=2e-3, rtol=2e-3)
    assert jnp.allclose(id_corrective, ref_id, atol=2e-3, rtol=2e-3)

    print("KERNEL_OK")
</pallas_src>

<mosaic_0001>
module attributes {stable_mosaic.version = 11 : i64} {
  func.func @_dual_mlp_kernel(%arg0: i32, %arg1: memref<8x128xbf16, #tpu.memory_space<vmem>>, %arg2: memref<128x256xbf16, #tpu.memory_space<vmem>>, %arg3: memref<1x256xf32, #tpu.memory_space<vmem>>, %arg4: memref<256x128xbf16, #tpu.memory_space<vmem>>, %arg5: memref<1x128xf32, #tpu.memory_space<vmem>>, %arg6: memref<8x128xbf16, #tpu.memory_space<vmem>>, %arg7: memref<128x256xbf16, #tpu.memory_space<vmem>>, %arg8: memref<1x256xf32, #tpu.memory_space<vmem>>, %arg9: memref<256x128xbf16, #tpu.memory_space<vmem>>, %arg10: memref<1x128xf32, #tpu.memory_space<vmem>>, %arg11: memref<8x128xf32, #tpu.memory_space<vmem>>, %arg12: memref<8x128xf32, #tpu.memory_space<vmem>>) attributes {dimension_semantics = [#tpu.dimension_semantics<parallel>], iteration_bounds = array<i64: 1>, scalar_prefetch = 0 : i64, scratch_operands = 0 : i64, tpu.core_type = #tpu.core_type<tc>, window_params = [{pipeline_mode = #tpu.pipeline_mode<synchronous>, transform_indices = @transform_0, window_bounds = array<i64: 8, 128>}, {pipeline_mode = #tpu.pipeline_mode<synchronous>, transform_indices = @transform_1, window_bounds = array<i64: 128, 256>}, {pipeline_mode = #tpu.pipeline_mode<synchronous>, transform_indices = @transform_2, window_bounds = array<i64: 1, 256>}, {transform_indices = @transform_3, window_bounds = array<i64: 256, 128>}, {transform_indices = @transform_4, window_bounds = array<i64: 1, 128>}, {pipeline_mode = #tpu.pipeline_mode<synchronous>, transform_indices = @transform_5, window_bounds = array<i64: 8, 128>}, {pipeline_mode = #tpu.pipeline_mode<synchronous>, transform_indices = @transform_6, window_bounds = array<i64: 128, 256>}, {pipeline_mode = #tpu.pipeline_mode<synchronous>, transform_indices = @transform_7, window_bounds = array<i64: 1, 256>}, {transform_indices = @transform_8, window_bounds = array<i64: 256, 128>}, {transform_indices = @transform_9, window_bounds = array<i64: 1, 128>}, {transform_indices = @transform_10, window_bounds = array<i64: 8, 128>}, {transform_indices = @transform_11, window_bounds = array<i64: 8, 128>}]} {
    %c0 = arith.constant 0 : index
    %c0_0 = arith.constant 0 : index
    %0 = vector.load %arg1[%c0, %c0_0] : memref<8x128xbf16, #tpu.memory_space<vmem>>, vector<8x128xbf16>
    %c0_1 = arith.constant 0 : index
    %c0_2 = arith.constant 0 : index
    %1 = vector.load %arg2[%c0_1, %c0_2] : memref<128x256xbf16, #tpu.memory_space<vmem>>, vector<128x256xbf16>
    %cst = arith.constant dense<0.000000e+00> : vector<8x256xf32>
    %2 = tpu.matmul %0, %1, %cst {dimension_numbers = #tpu.dot_dimension_numbers<[1], [0], [0], [1], [0, 0, 1, 1], [], []>} : vector<8x128xbf16>, vector<128x256xbf16>, vector<8x256xf32> -> vector<8x256xf32>
    %c0_3 = arith.constant 0 : index
    %c0_4 = arith.constant 0 : index
    %3 = vector.load %arg3[%c0_3, %c0_4] : memref<1x256xf32, #tpu.memory_space<vmem>>, vector<1x256xf32>
    %4 = vector.broadcast %3 : vector<1x256xf32> to vector<8x256xf32>
    %5 = arith.addf %2, %4 : vector<8x256xf32>
    %cst_5 = arith.constant 0.000000e+00 : f32
    %6 = vector.broadcast %cst_5 : f32 to vector<8x256xf32>
    %7 = arith.maximumf %5, %6 : vector<8x256xf32>
    %8 = arith.truncf %7 : vector<8x256xf32> to vector<8x256xbf16>
    %c0_6 = arith.constant 0 : index
    %c0_7 = arith.constant 0 : index
    %9 = vector.load %arg4[%c0_6, %c0_7] : memref<256x128xbf16, #tpu.memory_space<vmem>>, vector<256x128xbf16>
    %cst_8 = arith.constant dense<0.000000e+00> : vector<8x128xf32>
    %10 = tpu.matmul %8, %9, %cst_8 {dimension_numbers = #tpu.dot_dimension_numbers<[1], [0], [0], [1], [0, 0, 1, 1], [], []>} : vector<8x256xbf16>, vector<256x128xbf16>, vector<8x128xf32> -> vector<8x128xf32>
    %c0_9 = arith.constant 0 : index
    %c0_10 = arith.constant 0 : index
    %11 = vector.load %arg5[%c0_9, %c0_10] : memref<1x128xf32, #tpu.memory_space<vmem>>, vector<1x128xf32>
    %12 = vector.broadcast %11 : vector<1x128xf32> to vector<8x128xf32>
    %13 = arith.addf %10, %12 : vector<8x128xf32>
    %c0_11 = arith.constant 0 : index
    %c0_12 = arith.constant 0 : index
    %14 = vector.load %arg11[%c0_11, %c0_12] : memref<8x128xf32, #tpu.memory_space<vmem>>, vector<8x128xf32>
    tpu.vector_store %arg11[%c0_11, %c0_12], %13 {strides = array<i32>} : memref<8x128xf32, #tpu.memory_space<vmem>>, vector<8x128xf32>,
    %c0_13 = arith.constant 0 : index
    %c0_14 = arith.constant 0 : index
    %15 = vector.load %arg6[%c0_13, %c0_14] : memref<8x128xbf16, #tpu.memory_space<vmem>>, vector<8x128xbf16>
    %c0_15 = arith.constant 0 : index
    %c0_16 = arith.constant 0 : index
    %16 = vector.load %arg7[%c0_15, %c0_16] : memref<128x256xbf16, #tpu.memory_space<vmem>>, vector<128x256xbf16>
    %cst_17 = arith.constant dense<0.000000e+00> : vector<8x256xf32>
    %17 = tpu.matmul %15, %16, %cst_17 {dimension_numbers = #tpu.dot_dimension_numbers<[1], [0], [0], [1], [0, 0, 1, 1], [], []>} : vector<8x128xbf16>, vector<128x256xbf16>, vector<8x256xf32> -> vector<8x256xf32>
    %c0_18 = arith.constant 0 : index
    %c0_19 = arith.constant 0 : index
    %18 = vector.load %arg8[%c0_18, %c0_19] : memref<1x256xf32, #tpu.memory_space<vmem>>, vector<1x256xf32>
    %19 = vector.broadcast %18 : vector<1x256xf32> to vector<8x256xf32>
    %20 = arith.addf %17, %19 : vector<8x256xf32>
    %cst_20 = arith.constant 0.000000e+00 : f32
    %21 = vector.broadcast %cst_20 : f32 to vector<8x256xf32>
    %22 = arith.maximumf %20, %21 : vector<8x256xf32>
    %23 = arith.truncf %22 : vector<8x256xf32> to vector<8x256xbf16>
    %c0_21 = arith.constant 0 : index
    %c0_22 = arith.constant 0 : index
    %24 = vector.load %arg9[%c0_21, %c0_22] : memref<256x128xbf16, #tpu.memory_space<vmem>>, vector<256x128xbf16>
    %cst_23 = arith.constant dense<0.000000e+00> : vector<8x128xf32>
    %25 = tpu.matmul %23, %24, %cst_23 {dimension_numbers = #tpu.dot_dimension_numbers<[1], [0], [0], [1], [0, 0, 1, 1], [], []>} : vector<8x256xbf16>, vector<256x128xbf16>, vector<8x128xf32> -> vector<8x128xf32>
    %c0_24 = arith.constant 0 : index
    %c0_25 = arith.constant 0 : index
    %26 = vector.load %arg10[%c0_24, %c0_25] : memref<1x128xf32, #tpu.memory_space<vmem>>, vector<1x128xf32>
    %27 = vector.broadcast %26 : vector<1x128xf32> to vector<8x128xf32>
    %28 = arith.addf %25, %27 : vector<8x128xf32>
    %c0_26 = arith.constant 0 : index
    %c0_27 = arith.constant 0 : index
    %29 = vector.load %arg12[%c0_26, %c0_27] : memref<8x128xf32, #tpu.memory_space<vmem>>, vector<8x128xf32>
    tpu.vector_store %arg12[%c0_26, %c0_27], %28 {strides = array<i32>} : memref<8x128xf32, #tpu.memory_space<vmem>>, vector<8x128xf32>,
    return
  }
  func.func @transform_0(%arg0: i32) -> (i32, i32) {
    %c0_i32 = arith.constant 0 : i32
    %c0_i32_0 = arith.constant 0 : i32
    %c0_i32_1 = arith.constant 0 : i32
    return %c0_i32, %c0_i32_0 : i32, i32
  }
  func.func @transform_1(%arg0: i32) -> (i32, i32) {
    %c0_i32 = arith.constant 0 : i32
    %c0_i32_0 = arith.constant 0 : i32
    %c0_i32_1 = arith.constant 0 : i32
    return %c0_i32, %c0_i32_0 : i32, i32
  }
  func.func @transform_2(%arg0: i32) -> (i32, i32) {
    %c0_i32 = arith.constant 0 : i32
    %c0_i32_0 = arith.constant 0 : i32
    %c0_i32_1 = arith.constant 0 : i32
    return %c0_i32, %c0_i32_0 : i32, i32
  }
  func.func @transform_3(%arg0: i32) -> (i32, i32) {
    %c0_i32 = arith.constant 0 : i32
    %c0_i32_0 = arith.constant 0 : i32
    return %c0_i32, %arg0 : i32, i32
  }
  func.func @transform_4(%arg0: i32) -> (i32, i32) {
    %c0_i32 = arith.constant 0 : i32
    %c0_i32_0 = arith.constant 0 : i32
    return %c0_i32, %arg0 : i32, i32
  }
  func.func @transform_5(%arg0: i32) -> (i32, i32) {
    %c0_i32 = arith.constant 0 : i32
    %c0_i32_0 = arith.constant 0 : i32
    %c0_i32_1 = arith.constant 0 : i32
    return %c0_i32, %c0_i32_0 : i32, i32
  }
  func.func @transform_6(%arg0: i32) -> (i32, i32) {
    %c0_i32 = arith.constant 0 : i32
    %c0_i32_0 = arith.constant 0 : i32
    %c0_i32_1 = arith.constant 0 : i32
    return %c0_i32, %c0_i32_0 : i32, i32
  }
  func.func @transform_7(%arg0: i32) -> (i32, i32) {
    %c0_i32 = arith.constant 0 : i32
    %c0_i32_0 = arith.constant 0 : i32
    %c0_i32_1 = arith.constant 0 : i32
    return %c0_i32, %c0_i32_0 : i32, i32
  }
  func.func @transform_8(%arg0: i32) -> (i32, i32) {
    %c0_i32 = arith.constant 0 : i32
    %c0_i32_0 = arith.constant 0 : i32
    return %c0_i32, %arg0 : i32, i32
  }
  func.func @transform_9(%arg0: i32) -> (i32, i32) {
    %c0_i32 = arith.constant 0 : i32
    %c0_i32_0 = arith.constant 0 : i32
    return %c0_i32, %arg0 : i32, i32
  }
  func.func @transform_10(%arg0: i32) -> (i32, i32) {
    %c0_i32 = arith.constant 0 : i32
    %c0_i32_0 = arith.constant 0 : i32
    return %c0_i32, %arg0 : i32, i32
  }
  func.func @transform_11(%arg0: i32) -> (i32, i32) {
    %c0_i32 = arith.constant 0 : i32
    %c0_i32_0 = arith.constant 0 : i32
    return %c0_i32, %arg0 : i32, i32
  }
}

</mosaic_0001>

<llo_original>
// kernel: tpu_custom_call.1
$region0: #{tpu_custom_call.1}
  #allocation0 [shape = 'u32[]', space=smem, size = 0x4, offset = 0x4, fixed_abs, tag = 'smem constant byte address 0x4 - core index']
  #allocation1 [shape = 'u32[72,128]{1,0:T(1,128)}', space=vmem, size = 0x9000, scoped, tag = 'internal scratch']
  %s0 = inlined_call_operand.hbm [shape: bf16[8,128], index: 0, kind: input, shape index: {}]
  %s1 = inlined_call_operand.hbm [shape: bf16[128,256], index: 1, kind: input, shape index: {}]
  %s2 = inlined_call_operand.hbm [shape: f32[1,256], index: 2, kind: input, shape index: {}]
  %s3 = inlined_call_operand.hbm [shape: bf16[256,128], index: 3, kind: input, shape index: {}]
  %s4 = inlined_call_operand.hbm [shape: f32[1,128], index: 4, kind: input, shape index: {}]
  %s5 = inlined_call_operand.vmem [shape: bf16[8,128], index: 5, kind: input, shape index: {}]
  %s6 = inlined_call_operand.hbm [shape: bf16[128,256], index: 6, kind: input, shape index: {}]
  %s7 = inlined_call_operand.vmem [shape: f32[1,256], index: 7, kind: input, shape index: {}]
  %s8 = inlined_call_operand.hbm [shape: bf16[256,128], index: 8, kind: input, shape index: {}]
  %s9 = inlined_call_operand.vmem [shape: f32[1,128], index: 9, kind: input, shape index: {}]
  %s10 = inlined_call_operand.hbm [shape: f32[8,128], index: 10, kind: output, shape index: {0}]
  %s11 = inlined_call_operand.hbm [shape: f32[8,128], index: 11, kind: output, shape index: {1}]
  %12 = xla_tuple %s10, %s11
  %s13 = sld [smem:[#allocation0]]
  $region86: #{tpu_custom_call.1} parent=0
    _
  %s15 = ssub.s32 1, %s13
  %s16 = scalar_select 0, %s15, %s13
  $region1: #{tpu_custom_call.1} parent=0
    #allocation2 [shape = 'u8[2048]{0}', space=vmem, size = 0x800, scoped, tag = 'input window, operand 0, single buffered']
    #allocation3 [shape = 's32[1]{0}', space=sflag, size = 0x4, scoped, tag = 'scoped memory for tpu_custom_call.1']
    #allocation4 [shape = 's32[1]{0}', space=sflag, size = 0x4, scoped, tag = 'scoped memory for tpu_custom_call.1']
    #allocation5 [shape = 'u8[65536]{0}', space=vmem, size = 0x10000, scoped, tag = 'input window, operand 1, single buffered']
    #allocation6 [shape = 's32[1]{0}', space=sflag, size = 0x4, scoped, tag = 'scoped memory for tpu_custom_call.1']
    #allocation7 [shape = 'u8[1024]{0}', space=vmem, size = 0x400, scoped, tag = 'input window, operand 2, single buffered']
    #allocation8 [shape = 'u8[65536]{0}', space=vmem, size = 0x10000, scoped, tag = 'input window, operand 3, single buffered']
    #allocation9 [shape = 's32[1]{0}', space=sflag, size = 0x4, scoped, tag = 'scoped memory for tpu_custom_call.1']
    #allocation10 [shape = 'u8[512]{0}', space=vmem, size = 0x400, scoped, tag = 'input window, operand 4, single buffered']
    #allocation11 [shape = 'u8[65536]{0}', space=vmem, size = 0x10000, scoped, tag = 'input window, operand 6, single buffered']
    #allocation12 [shape = 's32[1]{0}', space=sflag, size = 0x4, scoped, tag = 'scoped memory for tpu_custom_call.1']
    #allocation13 [shape = 'u8[65536]{0}', space=vmem, size = 0x10000, scoped, tag = 'input window, operand 8, single buffered']
    #allocation14 [shape = 'u8[4096]{0}', space=vmem, size = 0x1000, scoped, tag = 'output window, operand 0, single buffered']
    #allocation15 [shape = 'u8[4096]{0}', space=vmem, size = 0x1000, scoped, tag = 'output window, operand 1, single buffered']
    #allocation16 [shape = 's32[1]{0}', space=sflag, size = 0x4, scoped, tag = 'scoped memory for tpu_custom_call.1']
    %17 = vsyncpa [#allocation3], 0
    %18 = vsyncpa [#allocation6], 0
    %19 = vsyncpa [#allocation9], 0
    %20 = vsyncpa [#allocation12], 0
    %21 = vsyncpa [#allocation4], 0
    %22 = vsyncpa [#allocation16], 0
    // Predicated region
    $region2: #{tpu_custom_call.1} parent=1 // pred_check
      _
    $region3: #{tpu_custom_call.1} parent=1 // pred_check_branch
      %24 = sbr.rel (0) target = $region5
    $region4: #{tpu_custom_call.1} parent=1 // pred_region
      %26 = vsyncadd [#allocation3], 0
      %s28 = sshll.u32 %s0, 4
      %s29 = int_to_ptr.hbm [resolvable:$true] %s28
      %s30 = sshll.u32 [#allocation2], 4
      %s31 = int_to_ptr.vmem [resolvable:$true] %s30
      %33 = dma.hbm_to_vmem [thread:$0]  %s29, 64, %s31, [#allocation3]
    $region5: #{tpu_custom_call.1} parent=1 // pred_fallthru
      _
    // Predicated region
    $region6: #{tpu_custom_call.1} parent=1 // pred_check
      _
    $region7: #{tpu_custom_call.1} parent=1 // pred_check_branch
      %35 = sbr.rel (0) target = $region9
    $region8: #{tpu_custom_call.1} parent=1 // pred_region
      %37 = vsyncadd [#allocation6], 0
      %s38 = sshll.u32 %s1, 4
      %s39 = int_to_ptr.hbm [resolvable:$true] %s38
      %s40 = sshll.u32 [#allocation5], 4
      %s41 = int_to_ptr.vmem [resolvable:$true] %s40
      %46 = dma.hbm_to_vmem [thread:$0]  %s39, 2048, %s41, [#allocation6], 128, 128, 8
    $region9: #{tpu_custom_call.1} parent=1 // pred_fallthru
      _
    // Predicated region
    $region10: #{tpu_custom_call.1} parent=1 // pred_check
      _
    $region11: #{tpu_custom_call.1} parent=1 // pred_check_branch
      %48 = sbr.rel (0) target = $region13
    $region12: #{tpu_custom_call.1} parent=1 // pred_region
      %50 = vsyncadd [#allocation6], 0
      %s52 = sshll.u32 %s2, 4
      %s53 = int_to_ptr.hbm [resolvable:$true] %s52
      %s54 = sshll.u32 [#allocation7], 4
      %s55 = int_to_ptr.vmem [resolvable:$true] %s54
      %57 = dma.hbm_to_vmem [thread:$0]  %s53, 32, %s55, [#allocation6]
    $region13: #{tpu_custom_call.1} parent=1 // pred_fallthru
      _
    // Predicated region
    $region14: #{tpu_custom_call.1} parent=1 // pred_check
      _
    $region15: #{tpu_custom_call.1} parent=1 // pred_check_branch
      %59 = sbr.rel (0) target = $region17
    $region16: #{tpu_custom_call.1} parent=1 // pred_region
      %61 = vsyncadd [#allocation9], 0
      %s62 = sshll.u32 %s3, 4
      %s63 = int_to_ptr.hbm [resolvable:$true] %s62
      %s64 = sshll.u32 [#allocation8], 4
      %s65 = int_to_ptr.vmem [resolvable:$true] %s64
      %70 = dma.hbm_to_vmem [thread:$0]  %s63, 2048, %s65, [#allocation9], 64, 64, 4
    $region17: #{tpu_custom_call.1} parent=1 // pred_fallthru
      _
    // Predicated region
    $region18: #{tpu_custom_call.1} parent=1 // pred_check
      _
    $region19: #{tpu_custom_call.1} parent=1 // pred_check_branch
      %72 = sbr.rel (0) target = $region21
    $region20: #{tpu_custom_call.1} parent=1 // pred_region
      %74 = vsyncadd [#allocation9], 0
      %s76 = sshll.u32 %s4, 4
      %s77 = int_to_ptr.hbm [resolvable:$true] %s76
      %s78 = sshll.u32 [#allocation10], 4
      %s79 = int_to_ptr.vmem [resolvable:$true] %s78
      %81 = dma.hbm_to_vmem [thread:$0]  %s77, 16, %s79, [#allocation9]
    $region21: #{tpu_custom_call.1} parent=1 // pred_fallthru
      _
    // Predicated region
    $region22: #{tpu_custom_call.1} parent=1 // pred_check
      _
    $region23: #{tpu_custom_call.1} parent=1 // pred_check_branch
      %83 = sbr.rel (0) target = $region25
    $region24: #{tpu_custom_call.1} parent=1 // pred_region
      _
    $region25: #{tpu_custom_call.1} parent=1 // pred_fallthru
      _
    // Predicated region
    $region26: #{tpu_custom_call.1} parent=1 // pred_check
      _
    $region27: #{tpu_custom_call.1} parent=1 // pred_check_branch
      %85 = sbr.rel (0) target = $region29
    $region28: #{tpu_custom_call.1} parent=1 // pred_region
      %87 = vsyncadd [#allocation12], 0
      %s88 = sshll.u32 %s6, 4
      %s89 = int_to_ptr.hbm [resolvable:$true] %s88
      %s90 = sshll.u32 [#allocation11], 4
      %s91 = int_to_ptr.vmem [resolvable:$true] %s90
      %96 = dma.hbm_to_vmem [thread:$0]  %s89, 2048, %s91, [#allocation12], 128, 128, 8
    $region29: #{tpu_custom_call.1} parent=1 // pred_fallthru
      _
    // Predicated region
    $region30: #{tpu_custom_call.1} parent=1 // pred_check
      _
    $region31: #{tpu_custom_call.1} parent=1 // pred_check_branch
      %98 = sbr.rel (0) target = $region33
    $region32: #{tpu_custom_call.1} parent=1 // pred_region
      _
    $region33: #{tpu_custom_call.1} parent=1 // pred_fallthru
      _
    // Predicated region
    $region34: #{tpu_custom_call.1} parent=1 // pred_check
      _
    $region35: #{tpu_custom_call.1} parent=1 // pred_check_branch
      %100 = sbr.rel (0) target = $region37
    $region36: #{tpu_custom_call.1} parent=1 // pred_region
      %102 = vsyncadd [#allocation12], 0
      %s103 = sshll.u32 %s8, 4
      %s104 = int_to_ptr.hbm [resolvable:$true] %s103
      %s105 = sshll.u32 [#allocation13], 4
      %s106 = int_to_ptr.vmem [resolvable:$true] %s105
      %111 = dma.hbm_to_vmem [thread:$0]  %s104, 2048, %s106, [#allocation12], 64, 64, 4
    $region37: #{tpu_custom_call.1} parent=1 // pred_fallthru
      _
    // Predicated region
    $region38: #{tpu_custom_call.1} parent=1 // pred_check
      _
    $region39: #{tpu_custom_call.1} parent=1 // pred_check_branch
      %113 = sbr.rel (0) target = $region41
    $region40: #{tpu_custom_call.1} parent=1 // pred_region
      _
    $region41: #{tpu_custom_call.1} parent=1 // pred_fallthru
      _
    // Predicated region
    $region42: #{tpu_custom_call.1} parent=1 // pred_check
      _
    $region43: #{tpu_custom_call.1} parent=1 // pred_check_branch
      %115 = sbr.rel (0) target = $region45
    $region44: #{tpu_custom_call.1} parent=1 // pred_region
      %117 = dma.done [#allocation3], 64
    $region45: #{tpu_custom_call.1} parent=1 // pred_fallthru
      _
    // Predicated region
    $region46: #{tpu_custom_call.1} parent=1 // pred_check
      _
    $region47: #{tpu_custom_call.1} parent=1 // pred_check_branch
      %119 = sbr.rel (0) target = $region49
    $region48: #{tpu_custom_call.1} parent=1 // pred_region
      %121 = dma.done [#allocation6], 2048
    $region49: #{tpu_custom_call.1} parent=1 // pred_fallthru
      _
    // Predicated region
    $region50: #{tpu_custom_call.1} parent=1 // pred_check
      _
    $region51: #{tpu_custom_call.1} parent=1 // pred_check_branch
      %123 = sbr.rel (0) target = $region53
    $region52: #{tpu_custom_call.1} parent=1 // pred_region
      %125 = dma.done [#allocation6], 32
    $region53: #{tpu_custom_call.1} parent=1 // pred_fallthru
      _
    // Predicated region
    $region54: #{tpu_custom_call.1} parent=1 // pred_check
      _
    $region55: #{tpu_custom_call.1} parent=1 // pred_check_branch
      %127 = sbr.rel (0) target = $region57
    $region56: #{tpu_custom_call.1} parent=1 // pred_region
      %129 = dma.done [#allocation9], 2048
    $region57: #{tpu_custom_call.1} parent=1 // pred_fallthru
      _
    // Predicated region
    $region58: #{tpu_custom_call.1} parent=1 // pred_check
      _
    $region59: #{tpu_custom_call.1} parent=1 // pred_check_branch
      %131 = sbr.rel (0) target = $region61
    $region60: #{tpu_custom_call.1} parent=1 // pred_region
      %133 = dma.done [#allocation9], 16
    $region61: #{tpu_custom_call.1} parent=1 // pred_fallthru
      _
    // Predicated region
    $region62: #{tpu_custom_call.1} parent=1 // pred_check
      _
    $region63: #{tpu_custom_call.1} parent=1 // pred_check_branch
      %135 = sbr.rel (0) target = $region65
    $region64: #{tpu_custom_call.1} parent=1 // pred_region
      %137 = dma.done [#allocation12], 2048
    $region65: #{tpu_custom_call.1} parent=1 // pred_fallthru
      _
    // Predicated region
    $region66: #{tpu_custom_call.1} parent=1 // pred_check
      _
    $region67: #{tpu_custom_call.1} parent=1 // pred_check_branch
      %139 = sbr.rel (0) target = $region69
    $region68: #{tpu_custom_call.1} parent=1 // pred_region
      %141 = dma.done [#allocation12], 2048
    $region69: #{tpu_custom_call.1} parent=1 // pred_fallthru
      _
    %v142 = vld [vmem:[#allocation2] sm:$0xf]
    %v143 = vld [vmem:[#allocation5] sm:$0xff]
    %v144 = vld [vmem:[#allocation5 + $0x8] sm:$0xff]
    %v145 = vld [vmem:[#allocation5 + $0x10] sm:$0xff]
    %v146 = vld [vmem:[#allocation5 + $0x18] sm:$0xff]
    %v147 = vld [vmem:[#allocation5 + $0x20] sm:$0xff]
    %v148 = vld [vmem:[#allocation5 + $0x28] sm:$0xff]
    %v149 = vld [vmem:[#allocation5 + $0x30] sm:$0xff]
    %v150 = vld [vmem:[#allocation5 + $0x38] sm:$0xff]
    %v151 = vld [vmem:[#allocation5 + $0x40] sm:$0xff]
    %v152 = vld [vmem:[#allocation5 + $0x48] sm:$0xff]
    %v153 = vld [vmem:[#allocation5 + $0x50] sm:$0xff]
    %v154 = vld [vmem:[#allocation5 + $0x58] sm:$0xff]
    %v155 = vld [vmem:[#allocation5 + $0x60] sm:$0xff]
    %v156 = vld [vmem:[#allocation5 + $0x68] sm:$0xff]
    %v157 = vld [vmem:[#allocation5 + $0x70] sm:$0xff]
    %v158 = vld [vmem:[#allocation5 + $0x78] sm:$0xff]
    %v159 = vld [vmem:[#allocation7] sm:$0x3]
    %v161 = vperm.slane %v159, 0
    %v162 = vperm.slane %v159, 1
    %v181 = vunpack.c.l.b16 %v143
    %v182 = vunpack.c.h.b16 %v143
    %v183 = vunpack.c.l.b16 %v144
    %v184 = vunpack.c.h.b16 %v144
    %v185 = vunpack.c.l.b16 %v145
    %v186 = vunpack.c.h.b16 %v145
    %v187 = vunpack.c.l.b16 %v146
    %v188 = vunpack.c.h.b16 %v146
    %v189 = vunpack.c.l.b16 %v147
    %v190 = vunpack.c.h.b16 %v147
    %v191 = vunpack.c.l.b16 %v148
    %v192 = vunpack.c.h.b16 %v148
    %v193 = vunpack.c.l.b16 %v149
    %v194 = vunpack.c.h.b16 %v149
    %v195 = vunpack.c.l.b16 %v150
    %v196 = vunpack.c.h.b16 %v150
    %v197 = vunpack.c.l.b16 %v151
    %v198 = vunpack.c.h.b16 %v151
    %v199 = vunpack.c.l.b16 %v152
    %v200 = vunpack.c.h.b16 %v152
    %v201 = vunpack.c.l.b16 %v153
    %v202 = vunpack.c.h.b16 %v153
    %v203 = vunpack.c.l.b16 %v154
    %v204 = vunpack.c.h.b16 %v154
    %v205 = vunpack.c.l.b16 %v155
    %v206 = vunpack.c.h.b16 %v155
    %v207 = vunpack.c.l.b16 %v156
    %v208 = vunpack.c.h.b16 %v156
    %v209 = vunpack.c.l.b16 %v157
    %v210 = vunpack.c.h.b16 %v157
    %v211 = vunpack.c.l.b16 %v158
    %v212 = vunpack.c.h.b16 %v158
    %v213 = vpack.c.b16 %v183, %v181
    %v214 = vpack.c.b16 %v184, %v182
    %v215 = vpack.c.b16 %v187, %v185
    %v216 = vpack.c.b16 %v188, %v186
    %v217 = vpack.c.b16 %v191, %v189
    %v218 = vpack.c.b16 %v192, %v190
    %v219 = vpack.c.b16 %v195, %v193
    %v220 = vpack.c.b16 %v196, %v194
    %v221 = vpack.c.b16 %v199, %v197
    %v222 = vpack.c.b16 %v200, %v198
    %v223 = vpack.c.b16 %v203, %v201
    %v224 = vpack.c.b16 %v204, %v202
    %v225 = vpack.c.b16 %v207, %v205
    %v226 = vpack.c.b16 %v208, %v206
    %v227 = vpack.c.b16 %v211, %v209
    %v228 = vpack.c.b16 %v212, %v210
    %245 = vmatpush.bf16.msra.mxu0 %v227
    %246 = vmatpush.bf16.msra.mxu0 %v225
    %247 = vmatpush.bf16.msra.mxu0 %v223
    %248 = vmatpush.bf16.msra.mxu0 %v221
    %249 = vmatpush.bf16.msra.mxu0 %v219
    %250 = vmatpush.bf16.msra.mxu0 %v217
    %251 = vmatpush.bf16.msra.mxu0 %v215
    %252 = vmatpush.bf16.msra.mxu0 %v213
    %253 = vmatmul.bf16.gmra.mxu0 %v142
    %v254 = vpop.f32.mrf.mxu0
    %v255 = vadd.f32 %v161, %v254
    %v256 = vpop.f32.mrf.mxu0
    %257 = vdwg.mxu0
    %258 = vmatpush.bf16.msra.mxu0 %v228
    %259 = vmatpush.bf16.msra.mxu0 %v226
    %260 = vmatpush.bf16.msra.mxu0 %v224
    %261 = vmatpush.bf16.msra.mxu0 %v222
    %262 = vmatpush.bf16.msra.mxu0 %v220
    %263 = vmatpush.bf16.msra.mxu0 %v218
    %264 = vmatpush.bf16.msra.mxu0 %v216
    %265 = vmatpush.bf16.msra.mxu0 %v214
    %266 = vmatmul.bf16.gmra.mxu0 %v142
    %v267 = vpop.f32.mrf.mxu0
    %v268 = vadd.f32 %v162, %v267
    %v269 = vpop.f32.mrf.mxu0
    %270 = vdwg.mxu0
    %v271 = vmax.f32 %v255, 0.0
    %v272 = vmax.f32 %v268, 0.0
    %v273 = vpack.c.bf16 %v271, %v271
    %v274 = vpack.c.bf16 %v272, %v272
    %v275 = vld [vmem:[#allocation8] sm:$0xf]
    %v276 = vld [vmem:[#allocation8 + $0x4] sm:$0xf]
    %v277 = vld [vmem:[#allocation8 + $0x8] sm:$0xf]
    %v278 = vld [vmem:[#allocation8 + $0xc] sm:$0xf]
    %v279 = vld [vmem:[#allocation8 + $0x10] sm:$0xf]
    %v280 = vld [vmem:[#allocation8 + $0x14] sm:$0xf]
    %v281 = vld [vmem:[#allocation8 + $0x18] sm:$0xf]
    %v282 = vld [vmem:[#allocation8 + $0x1c] sm:$0xf]
    %v283 = vld [vmem:[#allocation8 + $0x20] sm:$0xf]
    %v284 = vld [vmem:[#allocation8 + $0x24] sm:$0xf]
    %v285 = vld [vmem:[#allocation8 + $0x28] sm:$0xf]
    %v286 = vld [vmem:[#allocation8 + $0x2c] sm:$0xf]
    %v287 = vld [vmem:[#allocation8 + $0x30] sm:$0xf]
    %v288 = vld [vmem:[#allocation8 + $0x34] sm:$0xf]
    %v289 = vld [vmem:[#allocation8 + $0x38] sm:$0xf]
    %v290 = vld [vmem:[#allocation8 + $0x3c] sm:$0xf]
    %v291 = vld [vmem:[#allocation8 + $0x40] sm:$0xf]
    %v292 = vld [vmem:[#allocation8 + $0x44] sm:$0xf]
    %v293 = vld [vmem:[#allocation8 + $0x48] sm:$0xf]
    %v294 = vld [vmem:[#allocation8 + $0x4c] sm:$0xf]
    %v295 = vld [vmem:[#allocation8 + $0x50] sm:$0xf]
    %v296 = vld [vmem:[#allocation8 + $0x54] sm:$0xf]
    %v297 = vld [vmem:[#allocation8 + $0x58] sm:$0xf]
    %v298 = vld [vmem:[#allocation8 + $0x5c] sm:$0xf]
    %v299 = vld [vmem:[#allocation8 + $0x60] sm:$0xf]
    %v300 = vld [vmem:[#allocation8 + $0x64] sm:$0xf]
    %v301 = vld [vmem:[#allocation8 + $0x68] sm:$0xf]
    %v302 = vld [vmem:[#allocation8 + $0x6c] sm:$0xf]
    %v303 = vld [vmem:[#allocation8 + $0x70] sm:$0xf]
    %v304 = vld [vmem:[#allocation8 + $0x74] sm:$0xf]
    %v305 = vld [vmem:[#allocation8 + $0x78] sm:$0xf]
    %v306 = vld [vmem:[#allocation8 + $0x7c] sm:$0xf]
    %v307 = vld [vmem:[#allocation10] sm:$0x1]
    %v309 = vperm.slane %v307, 0
    %v343 = vunpack.c.l.b16 %v275
    %v344 = vunpack.c.l.b16 %v276
    %v345 = vunpack.c.l.b16 %v277
    %v346 = vunpack.c.l.b16 %v278
    %v347 = vunpack.c.l.b16 %v279
    %v348 = vunpack.c.l.b16 %v280
    %v349 = vunpack.c.l.b16 %v281
    %v350 = vunpack.c.l.b16 %v282
    %v351 = vunpack.c.l.b16 %v283
    %v352 = vunpack.c.l.b16 %v284
    %v353 = vunpack.c.l.b16 %v285
    %v354 = vunpack.c.l.b16 %v286
    %v355 = vunpack.c.l.b16 %v287
    %v356 = vunpack.c.l.b16 %v288
    %v357 = vunpack.c.l.b16 %v289
    %v358 = vunpack.c.l.b16 %v290
    %v359 = vunpack.c.l.b16 %v291
    %v360 = vunpack.c.l.b16 %v292
    %v361 = vunpack.c.l.b16 %v293
    %v362 = vunpack.c.l.b16 %v294
    %v363 = vunpack.c.l.b16 %v295
    %v364 = vunpack.c.l.b16 %v296
    %v365 = vunpack.c.l.b16 %v297
    %v366 = vunpack.c.l.b16 %v298
    %v367 = vunpack.c.l.b16 %v299
    %v368 = vunpack.c.l.b16 %v300
    %v369 = vunpack.c.l.b16 %v301
    %v370 = vunpack.c.l.b16 %v302
    %v371 = vunpack.c.l.b16 %v303
    %v372 = vunpack.c.l.b16 %v304
    %v373 = vunpack.c.l.b16 %v305
    %v374 = vunpack.c.l.b16 %v306
    %v375 = vpack.c.b16 %v344, %v343
    %v376 = vpack.c.b16 %v346, %v345
    %v377 = vpack.c.b16 %v348, %v347
    %v378 = vpack.c.b16 %v350, %v349
    %v379 = vpack.c.b16 %v352, %v351
    %v380 = vpack.c.b16 %v354, %v353
    %v381 = vpack.c.b16 %v356, %v355
    %v382 = vpack.c.b16 %v358, %v357
    %v383 = vpack.c.b16 %v360, %v359
    %v384 = vpack.c.b16 %v362, %v361
    %v385 = vpack.c.b16 %v364, %v363
    %v386 = vpack.c.b16 %v366, %v365
    %v387 = vpack.c.b16 %v368, %v367
    %v388 = vpack.c.b16 %v370, %v369
    %v389 = vpack.c.b16 %v372, %v371
    %v390 = vpack.c.b16 %v374, %v373
    %407 = vmatpush.bf16.msra.mxu0 %v382
    %408 = vmatpush.bf16.msra.mxu0 %v381
    %409 = vmatpush.bf16.msra.mxu0 %v380
    %410 = vmatpush.bf16.msra.mxu0 %v379
    %411 = vmatpush.bf16.msra.mxu0 %v378
    %412 = vmatpush.bf16.msra.mxu0 %v377
    %413 = vmatpush.bf16.msra.mxu0 %v376
    %414 = vmatpush.bf16.msra.mxu0 %v375
    %415 = vmatmul.bf16.gmra.mxu0 %v273
    %v416 = vpop.f32.mrf.mxu0
    %v417 = vadd.f32 %v309, %v416
    %v418 = vpop.f32.mrf.mxu0
    %419 = vdwg.mxu0
    %420 = vmatpush.bf16.msra.mxu0 %v390
    %421 = vmatpush.bf16.msra.mxu0 %v389
    %422 = vmatpush.bf16.msra.mxu0 %v388
    %423 = vmatpush.bf16.msra.mxu0 %v387
    %424 = vmatpush.bf16.msra.mxu0 %v386
    %425 = vmatpush.bf16.msra.mxu0 %v385
    %426 = vmatpush.bf16.msra.mxu0 %v384
    %427 = vmatpush.bf16.msra.mxu0 %v383
    %428 = vmatmul.bf16.gmra.mxu0 %v274
    %v429 = vpop.f32.mrf.mxu0
    %v430 = vadd.f32 %v417, %v429
    %v431 = vpop.f32.mrf.mxu0
    %432 = vdwg.mxu0
    %433 = vst [vmem:[#allocation14] sm:$0xff] %v430
    %v434 = vld [vmem:[%s5] sm:$0xf]
    %v435 = vld [vmem:[#allocation11] sm:$0xff]
    %v436 = vld [vmem:[#allocation11 + $0x8] sm:$0xff]
    %v437 = vld [vmem:[#allocation11 + $0x10] sm:$0xff]
    %v438 = vld [vmem:[#allocation11 + $0x18] sm:$0xff]
    %v439 = vld [vmem:[#allocation11 + $0x20] sm:$0xff]
    %v440 = vld [vmem:[#allocation11 + $0x28] sm:$0xff]
    %v441 = vld [vmem:[#allocation11 + $0x30] sm:$0xff]
    %v442 = vld [vmem:[#allocation11 + $0x38] sm:$0xff]
    %v443 = vld [vmem:[#allocation11 + $0x40] sm:$0xff]
    %v444 = vld [vmem:[#allocation11 + $0x48] sm:$0xff]
    %v445 = vld [vmem:[#allocation11 + $0x50] sm:$0xff]
    %v446 = vld [vmem:[#allocation11 + $0x58] sm:$0xff]
    %v447 = vld [vmem:[#allocation11 + $0x60] sm:$0xff]
    %v448 = vld [vmem:[#allocation11 + $0x68] sm:$0xff]
    %v449 = vld [vmem:[#allocation11 + $0x70] sm:$0xff]
    %v450 = vld [vmem:[#allocation11 + $0x78] sm:$0xff]
    %v451 = vld [vmem:[%s7] sm:$0x3]
    %v453 = vperm.slane %v451, 0
    %v454 = vperm.slane %v451, 1
    %v473 = vunpack.c.l.b16 %v435
    %v474 = vunpack.c.h.b16 %v435
    %v475 = vunpack.c.l.b16 %v436
    %v476 = vunpack.c.h.b16 %v436
    %v477 = vunpack.c.l.b16 %v437
    %v478 = vunpack.c.h.b16 %v437
    %v479 = vunpack.c.l.b16 %v438
    %v480 = vunpack.c.h.b16 %v438
    %v481 = vunpack.c.l.b16 %v439
    %v482 = vunpack.c.h.b16 %v439
    %v483 = vunpack.c.l.b16 %v440
    %v484 = vunpack.c.h.b16 %v440
    %v485 = vunpack.c.l.b16 %v441
    %v486 = vunpack.c.h.b16 %v441
    %v487 = vunpack.c.l.b16 %v442
    %v488 = vunpack.c.h.b16 %v442
    %v489 = vunpack.c.l.b16 %v443
    %v490 = vunpack.c.h.b16 %v443
    %v491 = vunpack.c.l.b16 %v444
    %v492 = vunpack.c.h.b16 %v444
    %v493 = vunpack.c.l.b16 %v445
    %v494 = vunpack.c.h.b16 %v445
    %v495 = vunpack.c.l.b16 %v446
    %v496 = vunpack.c.h.b16 %v446
    %v497 = vunpack.c.l.b16 %v447
    %v498 = vunpack.c.h.b16 %v447
    %v499 = vunpack.c.l.b16 %v448
    %v500 = vunpack.c.h.b16 %v448
    %v501 = vunpack.c.l.b16 %v449
    %v502 = vunpack.c.h.b16 %v449
    %v503 = vunpack.c.l.b16 %v450
    %v504 = vunpack.c.h.b16 %v450
    %v505 = vpack.c.b16 %v475, %v473
    %v506 = vpack.c.b16 %v476, %v474
    %v507 = vpack.c.b16 %v479, %v477
    %v508 = vpack.c.b16 %v480, %v478
    %v509 = vpack.c.b16 %v483, %v481
    %v510 = vpack.c.b16 %v484, %v482
    %v511 = vpack.c.b16 %v487, %v485
    %v512 = vpack.c.b16 %v488, %v486
    %v513 = vpack.c.b16 %v491, %v489
    %v514 = vpack.c.b16 %v492, %v490
    %v515 = vpack.c.b16 %v495, %v493
    %v516 = vpack.c.b16 %v496, %v494
    %v517 = vpack.c.b16 %v499, %v497
    %v518 = vpack.c.b16 %v500, %v498
    %v519 = vpack.c.b16 %v503, %v501
    %v520 = vpack.c.b16 %v504, %v502
    %537 = vmatpush.bf16.msra.mxu0 %v519
    %538 = vmatpush.bf16.msra.mxu0 %v517
    %539 = vmatpush.bf16.msra.mxu0 %v515
    %540 = vmatpush.bf16.msra.mxu0 %v513
    %541 = vmatpush.bf16.msra.mxu0 %v511
    %542 = vmatpush.bf16.msra.mxu0 %v509
    %543 = vmatpush.bf16.msra.mxu0 %v507
    %544 = vmatpush.bf16.msra.mxu0 %v505
    %545 = vmatmul.bf16.gmra.mxu0 %v434
    %v546 = vpop.f32.mrf.mxu0
    %v547 = vadd.f32 %v453, %v546
    %v548 = vpop.f32.mrf.mxu0
    %549 = vdwg.mxu0
    %550 = vmatpush.bf16.msra.mxu0 %v520
    %551 = vmatpush.bf16.msra.mxu0 %v518
    %552 = vmatpush.bf16.msra.mxu0 %v516
    %553 = vmatpush.bf16.msra.mxu0 %v514
    %554 = vmatpush.bf16.msra.mxu0 %v512
    %555 = vmatpush.bf16.msra.mxu0 %v510
    %556 = vmatpush.bf16.msra.mxu0 %v508
    %557 = vmatpush.bf16.msra.mxu0 %v506
    %558 = vmatmul.bf16.gmra.mxu0 %v434
    %v559 = vpop.f32.mrf.mxu0
    %v560 = vadd.f32 %v454, %v559
    %v561 = vpop.f32.mrf.mxu0
    %562 = vdwg.mxu0
    %v563 = vmax.f32 %v547, 0.0
    %v564 = vmax.f32 %v560, 0.0
    %v565 = vpack.c.bf16 %v563, %v563
    %v566 = vpack.c.bf16 %v564, %v564
    %v567 = vld [vmem:[#allocation13] sm:$0xf]
    %v568 = vld [vmem:[#allocation13 + $0x4] sm:$0xf]
    %v569 = vld [vmem:[#allocation13 + $0x8] sm:$0xf]
    %v570 = vld [vmem:[#allocation13 + $0xc] sm:$0xf]
    %v571 = vld [vmem:[#allocation13 + $0x10] sm:$0xf]
    %v572 = vld [vmem:[#allocation13 + $0x14] sm:$0xf]
    %v573 = vld [vmem:[#allocation13 + $0x18] sm:$0xf]
    %v574 = vld [vmem:[#allocation13 + $0x1c] sm:$0xf]
    %v575 = vld [vmem:[#allocation13 + $0x20] sm:$0xf]
    %v576 = vld [vmem:[#allocation13 + $0x24] sm:$0xf]
    %v577 = vld [vmem:[#allocation13 + $0x28] sm:$0xf]
    %v578 = vld [vmem:[#allocation13 + $0x2c] sm:$0xf]
    %v579 = vld [vmem:[#allocation13 + $0x30] sm:$0xf]
    %v580 = vld [vmem:[#allocation13 + $0x34] sm:$0xf]
    %v581 = vld [vmem:[#allocation13 + $0x38] sm:$0xf]
    %v582 = vld [vmem:[#allocation13 + $0x3c] sm:$0xf]
    %v583 = vld [vmem:[#allocation13 + $0x40] sm:$0xf]
    %v584 = vld [vmem:[#allocation13 + $0x44] sm:$0xf]
    %v585 = vld [vmem:[#allocation13 + $0x48] sm:$0xf]
    %v586 = vld [vmem:[#allocation13 + $0x4c] sm:$0xf]
    %v587 = vld [vmem:[#allocation13 + $0x50] sm:$0xf]
    %v588 = vld [vmem:[#allocation13 + $0x54] sm:$0xf]
    %v589 = vld [vmem:[#allocation13 + $0x58] sm:$0xf]
    %v590 = vld [vmem:[#allocation13 + $0x5c] sm:$0xf]
    %v591 = vld [vmem:[#allocation13 + $0x60] sm:$0xf]
    %v592 = vld [vmem:[#allocation13 + $0x64] sm:$0xf]
    %v593 = vld [vmem:[#allocation13 + $0x68] sm:$0xf]
    %v594 = vld [vmem:[#allocation13 + $0x6c] sm:$0xf]
    %v595 = vld [vmem:[#allocation13 + $0x70] sm:$0xf]
    %v596 = vld [vmem:[#allocation13 + $0x74] sm:$0xf]
    %v597 = vld [vmem:[#allocation13 + $0x78] sm:$0xf]
    %v598 = vld [vmem:[#allocation13 + $0x7c] sm:$0xf]
    %v599 = vld [vmem:[%s9] sm:$0x1]
    %v601 = vperm.slane %v599, 0
    %v635 = vunpack.c.l.b16 %v567
    %v636 = vunpack.c.l.b16 %v568
    %v637 = vunpack.c.l.b16 %v569
    %v638 = vunpack.c.l.b16 %v570
    %v639 = vunpack.c.l.b16 %v571
    %v640 = vunpack.c.l.b16 %v572
    %v641 = vunpack.c.l.b16 %v573
    %v642 = vunpack.c.l.b16 %v574
    %v643 = vunpack.c.l.b16 %v575
    %v644 = vunpack.c.l.b16 %v576
    %v645 = vunpack.c.l.b16 %v577
    %v646 = vunpack.c.l.b16 %v578
    %v647 = vunpack.c.l.b16 %v579
    %v648 = vunpack.c.l.b16 %v580
    %v649 = vunpack.c.l.b16 %v581
    %v650 = vunpack.c.l.b16 %v582
    %v651 = vunpack.c.l.b16 %v583
    %v652 = vunpack.c.l.b16 %v584
    %v653 = vunpack.c.l.b16 %v585
    %v654 = vunpack.c.l.b16 %v586
    %v655 = vunpack.c.l.b16 %v587
    %v656 = vunpack.c.l.b16 %v588
    %v657 = vunpack.c.l.b16 %v589
    %v658 = vunpack.c.l.b16 %v590
    %v659 = vunpack.c.l.b16 %v591
    %v660 = vunpack.c.l.b16 %v592
    %v661 = vunpack.c.l.b16 %v593
    %v662 = vunpack.c.l.b16 %v594
    %v663 = vunpack.c.l.b16 %v595
    %v664 = vunpack.c.l.b16 %v596
    %v665 = vunpack.c.l.b16 %v597
    %v666 = vunpack.c.l.b16 %v598
    %v667 = vpack.c.b16 %v636, %v635
    %v668 = vpack.c.b16 %v638, %v637
    %v669 = vpack.c.b16 %v640, %v639
    %v670 = vpack.c.b16 %v642, %v641
    %v671 = vpack.c.b16 %v644, %v643
    %v672 = vpack.c.b16 %v646, %v645
    %v673 = vpack.c.b16 %v648, %v647
    %v674 = vpack.c.b16 %v650, %v649
    %v675 = vpack.c.b16 %v652, %v651
    %v676 = vpack.c.b16 %v654, %v653
    %v677 = vpack.c.b16 %v656, %v655
    %v678 = vpack.c.b16 %v658, %v657
    %v679 = vpack.c.b16 %v660, %v659
    %v680 = vpack.c.b16 %v662, %v661
    %v681 = vpack.c.b16 %v664, %v663
    %v682 = vpack.c.b16 %v666, %v665
    %699 = vmatpush.bf16.msra.mxu0 %v674
    %700 = vmatpush.bf16.msra.mxu0 %v673
    %701 = vmatpush.bf16.msra.mxu0 %v672
    %702 = vmatpush.bf16.msra.mxu0 %v671
    %703 = vmatpush.bf16.msra.mxu0 %v670
    %704 = vmatpush.bf16.msra.mxu0 %v669
    %705 = vmatpush.bf16.msra.mxu0 %v668
    %706 = vmatpush.bf16.msra.mxu0 %v667
    %707 = vmatmul.bf16.gmra.mxu0 %v565
    %v708 = vpop.f32.mrf.mxu0
    %v709 = vadd.f32 %v601, %v708
    %v710 = vpop.f32.mrf.mxu0
    %711 = vdwg.mxu0
    %712 = vmatpush.bf16.msra.mxu0 %v682
    %713 = vmatpush.bf16.msra.mxu0 %v681
    %714 = vmatpush.bf16.msra.mxu0 %v680
    %715 = vmatpush.bf16.msra.mxu0 %v679
    %716 = vmatpush.bf16.msra.mxu0 %v678
    %717 = vmatpush.bf16.msra.mxu0 %v677
    %718 = vmatpush.bf16.msra.mxu0 %v676
    %719 = vmatpush.bf16.msra.mxu0 %v675
    %720 = vmatmul.bf16.gmra.mxu0 %v566
    %v721 = vpop.f32.mrf.mxu0
    %v722 = vadd.f32 %v709, %v721
    %v723 = vpop.f32.mrf.mxu0
    %724 = vdwg.mxu0
    %725 = vst [vmem:[#allocation15] sm:$0xff] %v722
    // Predicated region
    $region70: #{tpu_custom_call.1} parent=1 // pred_check
      _
    $region71: #{tpu_custom_call.1} parent=1 // pred_check_branch
      %727 = sbr.rel (0) target = $region73
    $region72: #{tpu_custom_call.1} parent=1 // pred_region
      %729 = vsyncadd [#allocation4], 0
      %s731 = sshll.u32 [#allocation14], 4
      %s732 = int_to_ptr.vmem [resolvable:$true] %s731
      %s733 = sshll.u32 %s10, 4
      %s734 = int_to_ptr.hbm [resolvable:$true] %s733
      %736 = dma.vmem_to_hbm [thread:$0]  %s732, 128, %s734, [#allocation4]
    $region73: #{tpu_custom_call.1} parent=1 // pred_fallthru
      _
    // Predicated region
    $region74: #{tpu_custom_call.1} parent=1 // pred_check
      _
    $region75: #{tpu_custom_call.1} parent=1 // pred_check_branch
      %738 = sbr.rel (0) target = $region77
    $region76: #{tpu_custom_call.1} parent=1 // pred_region
      %740 = vsyncadd [#allocation16], 0
      %s742 = sshll.u32 [#allocation15], 4
      %s743 = int_to_ptr.vmem [resolvable:$true] %s742
      %s744 = sshll.u32 %s11, 4
      %s745 = int_to_ptr.hbm [resolvable:$true] %s744
      %747 = dma.vmem_to_hbm [thread:$0]  %s743, 128, %s745, [#allocation16]
    $region77: #{tpu_custom_call.1} parent=1 // pred_fallthru
      _
    // Predicated region
    $region78: #{tpu_custom_call.1} parent=1 // pred_check
      _
    $region79: #{tpu_custom_call.1} parent=1 // pred_check_branch
      %749 = sbr.rel (0) target = $region81
    $region80: #{tpu_custom_call.1} parent=1 // pred_region
      %751 = dma.done [#allocation4], 128
    $region81: #{tpu_custom_call.1} parent=1 // pred_fallthru
      _
    // Predicated region
    $region82: #{tpu_custom_call.1} parent=1 // pred_check
      _
    $region83: #{tpu_custom_call.1} parent=1 // pred_check_branch
      %753 = sbr.rel (0) target = $region85
    $region84: #{tpu_custom_call.1} parent=1 // pred_region
      %755 = dma.done [#allocation16], 128
    $region85: #{tpu_custom_call.1} parent=1 // pred_fallthru
      _
    %756 = vsyncpa [#allocation3], 1
    %757 = vsyncpa [#allocation6], 1
    %758 = vsyncpa [#allocation9], 1
    %759 = vsyncpa [#allocation12], 1
    %760 = vsyncpa [#allocation4], 1
    %761 = vsyncpa [#allocation16], 1

</llo_original>
